<compile_context>
chip_gen: v7x
topology: tpu7x:2x2x1
jax: 0.10.0
libtpu: 0.0.40
codegen_flags: <defaults>
</compile_context>

<pallas_src>
import functools

import jax
import jax.numpy as jnp
from jax.experimental import pallas as pl
from jax.experimental.pallas import tpu as pltpu

_HP = 128            # hidden dim (50) zero-padded to one full lane width
_FMA_FC1_MAX_K = 16  # below this input_dim, fc1 runs on the VPU instead of the MXU


def _round_up(n, m):
    return ((n + m - 1) // m) * m


def _mlp_kernel(x_ref, w1t_ref, b1_ref, w2t_ref, b2_ref, w3_ref, b3_ref, o_ref,
                *, input_dim, use_fma_fc1):
    """Transposed-activation MLP tile (batch along lanes everywhere).

    x_ref   : (input_dim, bm) f32        -- x^T tile
    w1t_ref : (_HP, input_dim)           -- fc1 weight^T, hidden zero-padded
    b1_ref  : (_HP, 1) f32
    w2t_ref : (_HP, _HP) mxu dtype       -- fc2 weight^T
    b2_ref  : (_HP, 1) f32
    w3_ref  : (1, _HP) mxu dtype         -- fc3 weight as a row
    b3_ref  : (1, 1) f32
    o_ref   : (1, bm) f32                -- sigmoid(fc3) for this batch tile
    """
    bm = x_ref.shape[1]

    # ---- fc1 -----------------------------------------------------------------
    if use_fma_fc1:
        # K = input_dim is tiny; an MXU pass would do 3/128 useful work, so use
        # `input_dim` broadcast FMAs over the (HP, bm) tile on the (near-idle)
        # VPU instead.  Kept in f32 (v5e has no bf16 VPU arithmetic).
        h1 = jnp.broadcast_to(b1_ref[...], (_HP, bm))
        for k in range(input_dim):                      # static, tiny unroll
            h1 = h1 + w1t_ref[:, k:k + 1] * x_ref[k:k + 1, :]
    else:
        # Large input_dim: use the MXU (w1t is already in the MXU dtype).
        h1 = jnp.dot(w1t_ref[...], x_ref[...].astype(w1t_ref.dtype),
                     preferred_element_type=jnp.float32) + b1_ref[...]
    h1 = jnp.maximum(h1, 0.0)                           # ReLU, (HP, bm) f32

    # ---- fc2 (MXU, bf16 operands, f32 accumulation) ---------------------------
    h2 = jnp.dot(w2t_ref[...], h1.astype(w2t_ref.dtype),
                 preferred_element_type=jnp.float32) + b2_ref[...]
    h2 = jnp.maximum(h2, 0.0)                           # ReLU, (HP, bm) f32

    # ---- fc3: (1, HP) @ (HP, bm) -> lane-dense (1, bm); no transposes --------
    z = jnp.dot(w3_ref[...], h2.astype(w3_ref.dtype),
                preferred_element_type=jnp.float32) + b3_ref[...]
    o_ref[...] = jax.nn.sigmoid(z).astype(o_ref.dtype)


def _choose_bm(batch, block_m):
    """Pick a batch tile: multiple of 128, as large as block_m allows, but
    keeping grid_m >= 2 when possible so both v7x TensorCores get work."""
    block_m = max(128, _round_up(block_m, 128))
    padded = _round_up(batch, 128)
    if padded <= 128:
        return 128                      # tiny batch: single lane-dense tile
    half = _round_up((padded + 1) // 2, 128)
    return min(block_m, half)


@functools.partial(jax.jit, static_argnames=("block_m", "mxu_dtype"))
def ours_neural_3d_forward(x, params, *, block_m=4096, mxu_dtype=jnp.bfloat16):
    """x: [batch, input_dim] float32 -> [batch, 1] float32."""
    w1, b1, w2, b2, w3, b3 = params
    batch, input_dim = x.shape
    hidden = w1.shape[1]                      # 50
    assert w2.shape == (hidden, hidden) and w3.shape == (hidden, 1)
    assert hidden <= _HP
    ph = _HP - hidden
    use_fma_fc1 = input_dim <= _FMA_FC1_MAX_K

    bm = _choose_bm(batch, block_m)
    padded_batch = _round_up(batch, bm)
    grid_m = padded_batch // bm

    # Transposed-activation layout: ship x as (input_dim, padded_batch).  The
    # per-tile x block is then (input_dim, bm) -- only sublane-padded to 8 rows
    # -- and the batch axis stays lane-dense end to end.  The wrapper-side
    # transpose of a 3-wide array is essentially free.
    xt = x.astype(jnp.float32).T
    if padded_batch != batch:
        xt = jnp.pad(xt, ((0, 0), (0, padded_batch - batch)))

    # Hidden dim zero-padded 50 -> 128.  Padded rows/cols stay exactly zero
    # through ReLU, so results are unchanged.
    w1t = jnp.pad(w1.T, ((0, ph), (0, 0)))                        # (HP, input_dim)
    b1c = jnp.pad(b1.reshape(hidden, 1), ((0, ph), (0, 0)))       # (HP, 1)
    w2t = jnp.pad(w2.T, ((0, ph), (0, ph))).astype(mxu_dtype)     # (HP, HP)
    b2c = jnp.pad(b2.reshape(hidden, 1), ((0, ph), (0, 0)))       # (HP, 1)
    w3r = jnp.pad(w3, ((0, ph), (0, 0))).T.astype(mxu_dtype)      # (1, HP)
    b3s = b3.reshape(1, 1)                                        # (1, 1)
    if not use_fma_fc1:
        w1t = w1t.astype(mxu_dtype)      # fc1 goes through the MXU in this case

    full = lambda shape: pl.BlockSpec(shape, lambda i: (0, 0))
    kernel = functools.partial(_mlp_kernel, input_dim=input_dim,
                               use_fma_fc1=use_fma_fc1)

    out = pl.pallas_call(
        kernel,
        out_shape=jax.ShapeDtypeStruct((1, padded_batch), jnp.float32),
        grid_spec=pltpu.PrefetchScalarGridSpec(
            num_scalar_prefetch=0,
            grid=(grid_m,),
            in_specs=[
                pl.BlockSpec((input_dim, bm), lambda i: (0, i)),   # x^T tile
                full((_HP, input_dim)),                            # w1^T
                full((_HP, 1)),                                    # b1
                full((_HP, _HP)),                                  # w2^T
                full((_HP, 1)),                                    # b2
                full((1, _HP)),                                    # w3 row
                full((1, 1)),                                      # b3
            ],
            # Lane-dense (1, bm) output row per grid step (unmasked stores).
            out_specs=pl.BlockSpec((1, bm), lambda i: (0, i)),
        ),
        compiler_params=pltpu.CompilerParams(
            dimension_semantics=("parallel",),
            # Padding-aware per-step VMEM (double-buffered blocks):
            #   x:   2 * round_up(input_dim, 8) * bm * 4 B
            #   out: 2 * 8 * bm * 4 B
            #   weights/biases: < 1 MiB total
            #   f32 intermediates (h1/h2 + casts): ~5 * 128 * bm * 4 B
            # ~11 MiB at bm = 4096 -> comfortably inside 32 MiB on every
            # generation, including v7x (64 MiB physical VMEM).
            vmem_limit_bytes=32 * 1024 * 1024,
        ),
    )(xt, w1t, b1c, w2t, b2c, w3r, b3s)

    # (1, padded_batch) row-major == batch order; restore (batch, 1).
    return out.reshape(padded_batch, 1)[:batch]


def init_params(key, input_dim, hidden=50, out_dim=1):
    """nn.Linear-style uniform(-1/sqrt(fan_in), 1/sqrt(fan_in)) init.

    Weights stored as [in, out] (transposed vs PyTorch's [out, in])."""
    k1, k2, k3, k4, k5, k6 = jax.random.split(key, 6)

    def lin(kw, kb, fan_in, fan_out):
        bound = 1.0 / jnp.sqrt(jnp.float32(fan_in))
        w = jax.random.uniform(kw, (fan_in, fan_out), jnp.float32, -bound, bound)
        b = jax.random.uniform(kb, (1, fan_out), jnp.float32, -bound, bound)
        return w, b

    w1, b1 = lin(k1, k2, input_dim, hidden)
    w2, b2 = lin(k3, k4, hidden, hidden)
    w3, b3 = lin(k5, k6, hidden, out_dim)
    return (w1, b1, w2, b2, w3, b3)


def _reference_forward(x, params):
    w1, b1, w2, b2, w3, b3 = params
    h1 = jnp.maximum(x @ w1 + b1, 0.0)
    h2 = jnp.maximum(h1 @ w2 + b2, 0.0)
    return jax.nn.sigmoid(h2 @ w3 + b3)


if __name__ == "__main__":
    key = jax.random.PRNGKey(0)
    k_x, k_p = jax.random.split(key)

    input_dim = 3  # "3D" input points
    params = init_params(k_p, input_dim)

    # Small, single-tile case with f32 MXU operands: exact path, tight tolerance.
    x_small = jax.random.normal(k_x, (16, input_dim), jnp.float32)
    out_small = jax.block_until_ready(
        ours_neural_3d_forward(x_small, params, mxu_dtype=jnp.float32))
    ref_small = _reference_forward(x_small, params)
    assert out_small.shape == (16, 1), out_small.shape
    assert jnp.allclose(out_small, ref_small, atol=1e-5, rtol=1e-5), "small mismatch"

    # Multi-tile case (batch padding, grid_m = 2 "parallel" tiles) with the
    # default bf16 MXU operands; sigmoid-bounded outputs -> loose tolerance.
    x_big = jax.random.normal(k_x, (1000, input_dim), jnp.float32)
    out_big = jax.block_until_ready(ours_neural_3d_forward(x_big, params))
    ref_big = _reference_forward(x_big, params)
    assert out_big.shape == (1000, 1), out_big.shape
    err = float(jnp.max(jnp.abs(out_big - ref_big)))
    assert jnp.allclose(out_big, ref_big, atol=2e-2), f"big mismatch, max_err={err}"

    print("KERNEL_OK")
</pallas_src>

<mosaic_0001>
module attributes {stable_mosaic.version = 11 : i64} {
  func.func @_mlp_kernel(%arg0: i32, %arg1: memref<3x128xf32, #tpu.memory_space<vmem>>, %arg2: memref<128x3xf32, #tpu.memory_space<vmem>>, %arg3: memref<128x1xf32, #tpu.memory_space<vmem>>, %arg4: memref<128x128xf32, #tpu.memory_space<vmem>>, %arg5: memref<128x1xf32, #tpu.memory_space<vmem>>, %arg6: memref<1x128xf32, #tpu.memory_space<vmem>>, %arg7: memref<1x1xf32, #tpu.memory_space<vmem>>, %arg8: memref<1x128xf32, #tpu.memory_space<vmem>>) attributes {dimension_semantics = [#tpu.dimension_semantics<parallel>], iteration_bounds = array<i64: 1>, scalar_prefetch = 0 : i64, scratch_operands = 0 : i64, tpu.core_type = #tpu.core_type<tc>, window_params = [{transform_indices = @transform_0, window_bounds = array<i64: 3, 128>}, {pipeline_mode = #tpu.pipeline_mode<synchronous>, transform_indices = @transform_1, window_bounds = array<i64: 128, 3>}, {pipeline_mode = #tpu.pipeline_mode<synchronous>, transform_indices = @transform_2, window_bounds = array<i64: 128, 1>}, {pipeline_mode = #tpu.pipeline_mode<synchronous>, transform_indices = @transform_3, window_bounds = array<i64: 128, 128>}, {pipeline_mode = #tpu.pipeline_mode<synchronous>, transform_indices = @transform_4, window_bounds = array<i64: 128, 1>}, {pipeline_mode = #tpu.pipeline_mode<synchronous>, transform_indices = @transform_5, window_bounds = array<i64: 1, 128>}, {pipeline_mode = #tpu.pipeline_mode<synchronous>, transform_indices = @transform_6, window_bounds = array<i64: 1, 1>}, {transform_indices = @transform_7, window_bounds = array<i64: 1, 128>}]} {
    %c0 = arith.constant 0 : index
    %c0_0 = arith.constant 0 : index
    %0 = vector.load %arg3[%c0, %c0_0] : memref<128x1xf32, #tpu.memory_space<vmem>>, vector<128x1xf32>
    %1 = vector.shape_cast %0 : vector<128x1xf32> to vector<128x1xf32>
    %2 = vector.broadcast %1 : vector<128x1xf32> to vector<128x128xf32>
    %c0_1 = arith.constant 0 : index
    %c0_2 = arith.constant 0 : index
    %3 = vector.load %arg2[%c0_1, %c0_2] : memref<128x3xf32, #tpu.memory_space<vmem>>, vector<128x1xf32>
    %c0_3 = arith.constant 0 : index
    %c0_4 = arith.constant 0 : index
    %4 = vector.load %arg1[%c0_3, %c0_4] : memref<3x128xf32, #tpu.memory_space<vmem>>, vector<1x128xf32>
    %5 = vector.broadcast %3 : vector<128x1xf32> to vector<128x128xf32>
    %6 = vector.broadcast %4 : vector<1x128xf32> to vector<128x128xf32>
    %7 = arith.mulf %5, %6 : vector<128x128xf32>
    %8 = arith.addf %2, %7 : vector<128x128xf32>
    %c0_5 = arith.constant 0 : index
    %c1 = arith.constant 1 : index
    %9 = vector.load %arg2[%c0_5, %c1] : memref<128x3xf32, #tpu.memory_space<vmem>>, vector<128x1xf32>
    %c1_6 = arith.constant 1 : index
    %c0_7 = arith.constant 0 : index
    %10 = vector.load %arg1[%c1_6, %c0_7] : memref<3x128xf32, #tpu.memory_space<vmem>>, vector<1x128xf32>
    %11 = vector.broadcast %9 : vector<128x1xf32> to vector<128x128xf32>
    %12 = vector.broadcast %10 : vector<1x128xf32> to vector<128x128xf32>
    %13 = arith.mulf %11, %12 : vector<128x128xf32>
    %14 = arith.addf %8, %13 : vector<128x128xf32>
    %c0_8 = arith.constant 0 : index
    %c2 = arith.constant 2 : index
    %15 = vector.load %arg2[%c0_8, %c2] : memref<128x3xf32, #tpu.memory_space<vmem>>, vector<128x1xf32>
    %c2_9 = arith.constant 2 : index
    %c0_10 = arith.constant 0 : index
    %16 = vector.load %arg1[%c2_9, %c0_10] : memref<3x128xf32, #tpu.memory_space<vmem>>, vector<1x128xf32>
    %17 = vector.broadcast %15 : vector<128x1xf32> to vector<128x128xf32>
    %18 = vector.broadcast %16 : vector<1x128xf32> to vector<128x128xf32>
    %19 = arith.mulf %17, %18 : vector<128x128xf32>
    %20 = arith.addf %14, %19 : vector<128x128xf32>
    %cst = arith.constant 0.000000e+00 : f32
    %21 = vector.broadcast %cst : f32 to vector<128x128xf32>
    %22 = arith.maximumf %20, %21 : vector<128x128xf32>
    %c0_11 = arith.constant 0 : index
    %c0_12 = arith.constant 0 : index
    %23 = vector.load %arg4[%c0_11, %c0_12] : memref<128x128xf32, #tpu.memory_space<vmem>>, vector<128x128xf32>
    %cst_13 = arith.constant dense<0.000000e+00> : vector<128x128xf32>
    %24 = tpu.matmul %23, %22, %cst_13 {dimension_numbers = #tpu.dot_dimension_numbers<[1], [0], [0], [1], [0, 0, 1, 1], [], []>} : vector<128x128xf32>, vector<128x128xf32>, vector<128x128xf32> -> vector<128x128xf32>
    %c0_14 = arith.constant 0 : index
    %c0_15 = arith.constant 0 : index
    %25 = vector.load %arg5[%c0_14, %c0_15] : memref<128x1xf32, #tpu.memory_space<vmem>>, vector<128x1xf32>
    %26 = vector.broadcast %25 : vector<128x1xf32> to vector<128x128xf32>
    %27 = arith.addf %24, %26 : vector<128x128xf32>
    %cst_16 = arith.constant 0.000000e+00 : f32
    %28 = vector.broadcast %cst_16 : f32 to vector<128x128xf32>
    %29 = arith.maximumf %27, %28 : vector<128x128xf32>
    %c0_17 = arith.constant 0 : index
    %c0_18 = arith.constant 0 : index
    %30 = vector.load %arg6[%c0_17, %c0_18] : memref<1x128xf32, #tpu.memory_space<vmem>>, vector<1x128xf32>
    %cst_19 = arith.constant dense<0.000000e+00> : vector<1x128xf32>
    %31 = tpu.matmul %30, %29, %cst_19 {dimension_numbers = #tpu.dot_dimension_numbers<[1], [0], [0], [1], [0, 0, 1, 1], [], []>} : vector<1x128xf32>, vector<128x128xf32>, vector<1x128xf32> -> vector<1x128xf32>
    %c0_20 = arith.constant 0 : index
    %c0_21 = arith.constant 0 : index
    %32 = vector.load %arg7[%c0_20, %c0_21] : memref<1x1xf32, #tpu.memory_space<vmem>>, vector<1x1xf32>
    %33 = vector.broadcast %32 : vector<1x1xf32> to vector<1x128xf32>
    %34 = arith.addf %31, %33 : vector<1x128xf32>
    %35 = arith.negf %34 : vector<1x128xf32>
    %36 = math.exp %35 : vector<1x128xf32>
    %cst_22 = arith.constant 1.000000e+00 : f32
    %37 = vector.broadcast %cst_22 : f32 to vector<1x128xf32>
    %38 = arith.addf %37, %36 : vector<1x128xf32>
    %39 = arith.divf %37, %38 : vector<1x128xf32>
    %c0_23 = arith.constant 0 : index
    %c0_24 = arith.constant 0 : index
    %40 = vector.load %arg8[%c0_23, %c0_24] : memref<1x128xf32, #tpu.memory_space<vmem>>, vector<1x128xf32>
    tpu.vector_store %arg8[%c0_23, %c0_24], %39 {strides = array<i32>} : memref<1x128xf32, #tpu.memory_space<vmem>>, vector<1x128xf32>,
    return
  }
  func.func @transform_0(%arg0: i32) -> (i32, i32) {
    %c0_i32 = arith.constant 0 : i32
    %c0_i32_0 = arith.constant 0 : i32
    return %c0_i32, %arg0 : i32, i32
  }
  func.func @transform_1(%arg0: i32) -> (i32, i32) {
    %c0_i32 = arith.constant 0 : i32
    %c0_i32_0 = arith.constant 0 : i32
    %c0_i32_1 = arith.constant 0 : i32
    return %c0_i32, %c0_i32_0 : i32, i32
  }
  func.func @transform_2(%arg0: i32) -> (i32, i32) {
    %c0_i32 = arith.constant 0 : i32
    %c0_i32_0 = arith.constant 0 : i32
    %c0_i32_1 = arith.constant 0 : i32
    return %c0_i32, %c0_i32_0 : i32, i32
  }
  func.func @transform_3(%arg0: i32) -> (i32, i32) {
    %c0_i32 = arith.constant 0 : i32
    %c0_i32_0 = arith.constant 0 : i32
    %c0_i32_1 = arith.constant 0 : i32
    return %c0_i32, %c0_i32_0 : i32, i32
  }
  func.func @transform_4(%arg0: i32) -> (i32, i32) {
    %c0_i32 = arith.constant 0 : i32
    %c0_i32_0 = arith.constant 0 : i32
    %c0_i32_1 = arith.constant 0 : i32
    return %c0_i32, %c0_i32_0 : i32, i32
  }
  func.func @transform_5(%arg0: i32) -> (i32, i32) {
    %c0_i32 = arith.constant 0 : i32
    %c0_i32_0 = arith.constant 0 : i32
    %c0_i32_1 = arith.constant 0 : i32
    return %c0_i32, %c0_i32_0 : i32, i32
  }
  func.func @transform_6(%arg0: i32) -> (i32, i32) {
    %c0_i32 = arith.constant 0 : i32
    %c0_i32_0 = arith.constant 0 : i32
    %c0_i32_1 = arith.constant 0 : i32
    return %c0_i32, %c0_i32_0 : i32, i32
  }
  func.func @transform_7(%arg0: i32) -> (i32, i32) {
    %c0_i32 = arith.constant 0 : i32
    %c0_i32_0 = arith.constant 0 : i32
    return %c0_i32, %arg0 : i32, i32
  }
}

</mosaic_0001>

<llo_original>
// kernel: ours_neural_3d_forward.1
$region0: #{ours_neural_3d_forward.1}
  #allocation0 [shape = 'u32[]', space=smem, size = 0x4, offset = 0x4, fixed_abs, tag = 'smem constant byte address 0x4 - core index']
  #allocation1 [shape = 'u32[144,128]{1,0:T(1,128)}', space=vmem, size = 0x12000, scoped, tag = 'internal scratch']
  #allocation2 [shape = 'f32[1,1]{1,0:T(1,128)S(1)}', space=vmem, size = 0x200, scoped, tag = 'scoped memory for ours_neural_3d_forward.1']
  %s0 = inlined_call_operand.vmem [shape: f32[3,128], index: 0, kind: input, shape index: {}]
  %s1 = inlined_call_operand.vmem [shape: f32[128,3], index: 1, kind: input, shape index: {}]
  %s2 = inlined_call_operand.vmem [shape: f32[128,1], index: 2, kind: input, shape index: {}]
  %s3 = inlined_call_operand.vmem [shape: f32[128,128], index: 3, kind: input, shape index: {}]
  %s4 = inlined_call_operand.vmem [shape: f32[128,1], index: 4, kind: input, shape index: {}]
  %s5 = inlined_call_operand.vmem [shape: f32[1,128], index: 5, kind: input, shape index: {}]
  %s6 = inlined_call_operand.<no memory space> [shape: f32[1,1], index: 6, kind: input, shape index: {}]
  %s7 = inlined_call_operand.vmem [shape: f32[1,128], index: 7, kind: output, shape index: {}]
  %s8 = sld [smem:[#allocation0]]
  $region38: #{ours_neural_3d_forward.1} parent=0
    _
  %s10 = ssub.s32 1, %s8
  %s11 = scalar_select 0, %s10, %s8
  %v12 = vstv %s6
  %13 = vst [vmem:[#allocation2] sm:$0x1] %v12
  // Predicated region
  $region2: #{ours_neural_3d_forward.1} parent=0 // pred_check
    _
  $region3: #{ours_neural_3d_forward.1} parent=0 // pred_check_branch
    %15 = sbr.rel (0) target = $region5
  $region4: #{ours_neural_3d_forward.1} parent=0 // pred_region
    _
  $region5: #{ours_neural_3d_forward.1} parent=0 // pred_fallthru
    _
  // Predicated region
  $region6: #{ours_neural_3d_forward.1} parent=0 // pred_check
    _
  $region7: #{ours_neural_3d_forward.1} parent=0 // pred_check_branch
    %17 = sbr.rel (0) target = $region9
  $region8: #{ours_neural_3d_forward.1} parent=0 // pred_region
    _
  $region9: #{ours_neural_3d_forward.1} parent=0 // pred_fallthru
    _
  // Predicated region
  $region10: #{ours_neural_3d_forward.1} parent=0 // pred_check
    _
  $region11: #{ours_neural_3d_forward.1} parent=0 // pred_check_branch
    %19 = sbr.rel (0) target = $region13
  $region12: #{ours_neural_3d_forward.1} parent=0 // pred_region
    _
  $region13: #{ours_neural_3d_forward.1} parent=0 // pred_fallthru
    _
  // Predicated region
  $region14: #{ours_neural_3d_forward.1} parent=0 // pred_check
    _
  $region15: #{ours_neural_3d_forward.1} parent=0 // pred_check_branch
    %21 = sbr.rel (0) target = $region17
  $region16: #{ours_neural_3d_forward.1} parent=0 // pred_region
    _
  $region17: #{ours_neural_3d_forward.1} parent=0 // pred_fallthru
    _
  // Predicated region
  $region18: #{ours_neural_3d_forward.1} parent=0 // pred_check
    _
  $region19: #{ours_neural_3d_forward.1} parent=0 // pred_check_branch
    %23 = sbr.rel (0) target = $region21
  $region20: #{ours_neural_3d_forward.1} parent=0 // pred_region
    _
  $region21: #{ours_neural_3d_forward.1} parent=0 // pred_fallthru
    _
  // Predicated region
  $region22: #{ours_neural_3d_forward.1} parent=0 // pred_check
    _
  $region23: #{ours_neural_3d_forward.1} parent=0 // pred_check_branch
    %25 = sbr.rel (0) target = $region25
  $region24: #{ours_neural_3d_forward.1} parent=0 // pred_region
    _
  $region25: #{ours_neural_3d_forward.1} parent=0 // pred_fallthru
    _
  // Predicated region
  $region26: #{ours_neural_3d_forward.1} parent=0 // pred_check
    _
  $region27: #{ours_neural_3d_forward.1} parent=0 // pred_check_branch
    %27 = sbr.rel (0) target = $region29
  $region28: #{ours_neural_3d_forward.1} parent=0 // pred_region
    _
  $region29: #{ours_neural_3d_forward.1} parent=0 // pred_fallthru
    _
  %v28 = vld [vmem:[%s2] sm:$0xff]
  %v29 = vld [vmem:[%s2 + $0x8] sm:$0xff]
  %v30 = vld [vmem:[%s2 + $0x10] sm:$0xff]
  %v31 = vld [vmem:[%s2 + $0x18] sm:$0xff]
  %v32 = vld [vmem:[%s2 + $0x20] sm:$0xff]
  %v33 = vld [vmem:[%s2 + $0x28] sm:$0xff]
  %v34 = vld [vmem:[%s2 + $0x30] sm:$0xff]
  %v35 = vld [vmem:[%s2 + $0x38] sm:$0xff]
  %v36 = vld [vmem:[%s2 + $0x40] sm:$0xff]
  %v37 = vld [vmem:[%s2 + $0x48] sm:$0xff]
  %v38 = vld [vmem:[%s2 + $0x50] sm:$0xff]
  %v39 = vld [vmem:[%s2 + $0x58] sm:$0xff]
  %v40 = vld [vmem:[%s2 + $0x60] sm:$0xff]
  %v41 = vld [vmem:[%s2 + $0x68] sm:$0xff]
  %v42 = vld [vmem:[%s2 + $0x70] sm:$0xff]
  %v43 = vld [vmem:[%s2 + $0x78] sm:$0xff]
  %45 = vset.pattern.permute.xlu0 0
  %46 = vperm.xlu0 %45, %v28
  %v47 = vpop.permute.xlu0 %46
  %50 = vset.pattern.permute.xlu0 0
  %51 = vperm.xlu0 %50, %v29
  %v52 = vpop.permute.xlu0 %51
  %55 = vset.pattern.permute.xlu0 0
  %56 = vperm.xlu0 %55, %v30
  %v57 = vpop.permute.xlu0 %56
  %60 = vset.pattern.permute.xlu0 0
  %61 = vperm.xlu0 %60, %v31
  %v62 = vpop.permute.xlu0 %61
  %65 = vset.pattern.permute.xlu0 0
  %66 = vperm.xlu0 %65, %v32
  %v67 = vpop.permute.xlu0 %66
  %70 = vset.pattern.permute.xlu0 0
  %71 = vperm.xlu0 %70, %v33
  %v72 = vpop.permute.xlu0 %71
  %75 = vset.pattern.permute.xlu0 0
  %76 = vperm.xlu0 %75, %v34
  %v77 = vpop.permute.xlu0 %76
  %80 = vset.pattern.permute.xlu0 0
  %81 = vperm.xlu0 %80, %v35
  %v82 = vpop.permute.xlu0 %81
  %85 = vset.pattern.permute.xlu0 0
  %86 = vperm.xlu0 %85, %v36
  %v87 = vpop.permute.xlu0 %86
  %90 = vset.pattern.permute.xlu0 0
  %91 = vperm.xlu0 %90, %v37
  %v92 = vpop.permute.xlu0 %91
  %95 = vset.pattern.permute.xlu0 0
  %96 = vperm.xlu0 %95, %v38
  %v97 = vpop.permute.xlu0 %96
  %100 = vset.pattern.permute.xlu0 0
  %101 = vperm.xlu0 %100, %v39
  %v102 = vpop.permute.xlu0 %101
  %105 = vset.pattern.permute.xlu0 0
  %106 = vperm.xlu0 %105, %v40
  %v107 = vpop.permute.xlu0 %106
  %110 = vset.pattern.permute.xlu0 0
  %111 = vperm.xlu0 %110, %v41
  %v112 = vpop.permute.xlu0 %111
  %115 = vset.pattern.permute.xlu0 0
  %116 = vperm.xlu0 %115, %v42
  %v117 = vpop.permute.xlu0 %116
  %120 = vset.pattern.permute.xlu0 0
  %121 = vperm.xlu0 %120, %v43
  %v122 = vpop.permute.xlu0 %121
  %v124 = vld [vmem:[%s1] sm:$0xff]
  %v125 = vld [vmem:[%s1 + $0x8] sm:$0xff]
  %v126 = vld [vmem:[%s1 + $0x10] sm:$0xff]
  %v127 = vld [vmem:[%s1 + $0x18] sm:$0xff]
  %v128 = vld [vmem:[%s1 + $0x20] sm:$0xff]
  %v129 = vld [vmem:[%s1 + $0x28] sm:$0xff]
  %v130 = vld [vmem:[%s1 + $0x30] sm:$0xff]
  %v131 = vld [vmem:[%s1 + $0x38] sm:$0xff]
  %v132 = vld [vmem:[%s1 + $0x40] sm:$0xff]
  %v133 = vld [vmem:[%s1 + $0x48] sm:$0xff]
  %v134 = vld [vmem:[%s1 + $0x50] sm:$0xff]
  %v135 = vld [vmem:[%s1 + $0x58] sm:$0xff]
  %v136 = vld [vmem:[%s1 + $0x60] sm:$0xff]
  %v137 = vld [vmem:[%s1 + $0x68] sm:$0xff]
  %v138 = vld [vmem:[%s1 + $0x70] sm:$0xff]
  %v139 = vld [vmem:[%s1 + $0x78] sm:$0xff]
  %v140 = vld [vmem:[%s0] sm:$0x1]
  %142 = vset.pattern.permute.xlu0 0
  %143 = vperm.xlu0 %142, %v124
  %v144 = vpop.permute.xlu0 %143
  %147 = vset.pattern.permute.xlu0 0
  %148 = vperm.xlu0 %147, %v125
  %v149 = vpop.permute.xlu0 %148
  %152 = vset.pattern.permute.xlu0 0
  %153 = vperm.xlu0 %152, %v126
  %v154 = vpop.permute.xlu0 %153
  %157 = vset.pattern.permute.xlu0 0
  %158 = vperm.xlu0 %157, %v127
  %v159 = vpop.permute.xlu0 %158
  %162 = vset.pattern.permute.xlu0 0
  %163 = vperm.xlu0 %162, %v128
  %v164 = vpop.permute.xlu0 %163
  %167 = vset.pattern.permute.xlu0 0
  %168 = vperm.xlu0 %167, %v129
  %v169 = vpop.permute.xlu0 %168
  %172 = vset.pattern.permute.xlu0 0
  %173 = vperm.xlu0 %172, %v130
  %v174 = vpop.permute.xlu0 %173
  %177 = vset.pattern.permute.xlu0 0
  %178 = vperm.xlu0 %177, %v131
  %v179 = vpop.permute.xlu0 %178
  %182 = vset.pattern.permute.xlu0 0
  %183 = vperm.xlu0 %182, %v132
  %v184 = vpop.permute.xlu0 %183
  %187 = vset.pattern.permute.xlu0 0
  %188 = vperm.xlu0 %187, %v133
  %v189 = vpop.permute.xlu0 %188
  %192 = vset.pattern.permute.xlu0 0
  %193 = vperm.xlu0 %192, %v134
  %v194 = vpop.permute.xlu0 %193
  %197 = vset.pattern.permute.xlu0 0
  %198 = vperm.xlu0 %197, %v135
  %v199 = vpop.permute.xlu0 %198
  %202 = vset.pattern.permute.xlu0 0
  %203 = vperm.xlu0 %202, %v136
  %v204 = vpop.permute.xlu0 %203
  %207 = vset.pattern.permute.xlu0 0
  %208 = vperm.xlu0 %207, %v137
  %v209 = vpop.permute.xlu0 %208
  %212 = vset.pattern.permute.xlu0 0
  %213 = vperm.xlu0 %212, %v138
  %v214 = vpop.permute.xlu0 %213
  %217 = vset.pattern.permute.xlu0 0
  %218 = vperm.xlu0 %217, %v139
  %v219 = vpop.permute.xlu0 %218
  %v221 = vlaneseq
  %v222 = vshrl.u32 %v221, 7
  %v223 = vsub.s32 0, %v222
  %v224 = vrot.slane %v140, %v223
  %v225 = vmul.f32 %v144, %v224
  %v226 = vmul.f32 %v149, %v224
  %v227 = vmul.f32 %v154, %v224
  %v228 = vmul.f32 %v159, %v224
  %v229 = vmul.f32 %v164, %v224
  %v230 = vmul.f32 %v169, %v224
  %v231 = vmul.f32 %v174, %v224
  %v232 = vmul.f32 %v179, %v224
  %v233 = vmul.f32 %v184, %v224
  %v234 = vmul.f32 %v189, %v224
  %v235 = vmul.f32 %v194, %v224
  %v236 = vmul.f32 %v199, %v224
  %v237 = vmul.f32 %v204, %v224
  %v238 = vmul.f32 %v209, %v224
  %v239 = vmul.f32 %v214, %v224
  %v240 = vmul.f32 %v219, %v224
  %v241 = vadd.f32 %v47, %v225
  %v242 = vadd.f32 %v52, %v226
  %v243 = vadd.f32 %v57, %v227
  %v244 = vadd.f32 %v62, %v228
  %v245 = vadd.f32 %v67, %v229
  %v246 = vadd.f32 %v72, %v230
  %v247 = vadd.f32 %v77, %v231
  %v248 = vadd.f32 %v82, %v232
  %v249 = vadd.f32 %v87, %v233
  %v250 = vadd.f32 %v92, %v234
  %v251 = vadd.f32 %v97, %v235
  %v252 = vadd.f32 %v102, %v236
  %v253 = vadd.f32 %v107, %v237
  %v254 = vadd.f32 %v112, %v238
  %v255 = vadd.f32 %v117, %v239
  %v256 = vadd.f32 %v122, %v240
  %v257 = vld [vmem:[%s0 + $0x1] sm:$0x1]
  %258 = vset.pattern.permute.xlu0 1
  %259 = vperm.xlu0 %258, %v124
  %v260 = vpop.permute.xlu0 %259
  %262 = vset.pattern.permute.xlu0 1
  %263 = vperm.xlu0 %262, %v125
  %v264 = vpop.permute.xlu0 %263
  %266 = vset.pattern.permute.xlu0 1
  %267 = vperm.xlu0 %266, %v126
  %v268 = vpop.permute.xlu0 %267
  %270 = vset.pattern.permute.xlu0 1
  %271 = vperm.xlu0 %270, %v127
  %v272 = vpop.permute.xlu0 %271
  %274 = vset.pattern.permute.xlu0 1
  %275 = vperm.xlu0 %274, %v128
  %v276 = vpop.permute.xlu0 %275
  %278 = vset.pattern.permute.xlu0 1
  %279 = vperm.xlu0 %278, %v129
  %v280 = vpop.permute.xlu0 %279
  %282 = vset.pattern.permute.xlu0 1
  %283 = vperm.xlu0 %282, %v130
  %v284 = vpop.permute.xlu0 %283
  %286 = vset.pattern.permute.xlu0 1
  %287 = vperm.xlu0 %286, %v131
  %v288 = vpop.permute.xlu0 %287
  %290 = vset.pattern.permute.xlu0 1
  %291 = vperm.xlu0 %290, %v132
  %v292 = vpop.permute.xlu0 %291
  %294 = vset.pattern.permute.xlu0 1
  %295 = vperm.xlu0 %294, %v133
  %v296 = vpop.permute.xlu0 %295
  %298 = vset.pattern.permute.xlu0 1
  %299 = vperm.xlu0 %298, %v134
  %v300 = vpop.permute.xlu0 %299
  %302 = vset.pattern.permute.xlu0 1
  %303 = vperm.xlu0 %302, %v135
  %v304 = vpop.permute.xlu0 %303
  %306 = vset.pattern.permute.xlu0 1
  %307 = vperm.xlu0 %306, %v136
  %v308 = vpop.permute.xlu0 %307
  %310 = vset.pattern.permute.xlu0 1
  %311 = vperm.xlu0 %310, %v137
  %v312 = vpop.permute.xlu0 %311
  %314 = vset.pattern.permute.xlu0 1
  %315 = vperm.xlu0 %314, %v138
  %v316 = vpop.permute.xlu0 %315
  %318 = vset.pattern.permute.xlu0 1
  %319 = vperm.xlu0 %318, %v139
  %v320 = vpop.permute.xlu0 %319
  %v322 = vlaneseq
  %v323 = vshrl.u32 %v322, 7
  %v324 = vsub.s32 0, %v323
  %v325 = vrot.slane %v257, %v324
  %v326 = vmul.f32 %v260, %v325
  %v327 = vmul.f32 %v264, %v325
  %v328 = vmul.f32 %v268, %v325
  %v329 = vmul.f32 %v272, %v325
  %v330 = vmul.f32 %v276, %v325
  %v331 = vmul.f32 %v280, %v325
  %v332 = vmul.f32 %v284, %v325
  %v333 = vmul.f32 %v288, %v325
  %v334 = vmul.f32 %v292, %v325
  %v335 = vmul.f32 %v296, %v325
  %v336 = vmul.f32 %v300, %v325
  %v337 = vmul.f32 %v304, %v325
  %v338 = vmul.f32 %v308, %v325
  %v339 = vmul.f32 %v312, %v325
  %v340 = vmul.f32 %v316, %v325
  %v341 = vmul.f32 %v320, %v325
  %v342 = vadd.f32 %v241, %v326
  %v343 = vadd.f32 %v242, %v327
  %v344 = vadd.f32 %v243, %v328
  %v345 = vadd.f32 %v244, %v329
  %v346 = vadd.f32 %v245, %v330
  %v347 = vadd.f32 %v246, %v331
  %v348 = vadd.f32 %v247, %v332
  %v349 = vadd.f32 %v248, %v333
  %v350 = vadd.f32 %v249, %v334
  %v351 = vadd.f32 %v250, %v335
  %v352 = vadd.f32 %v251, %v336
  %v353 = vadd.f32 %v252, %v337
  %v354 = vadd.f32 %v253, %v338
  %v355 = vadd.f32 %v254, %v339
  %v356 = vadd.f32 %v255, %v340
  %v357 = vadd.f32 %v256, %v341
  %v358 = vld [vmem:[%s0 + $0x2] sm:$0x1]
  %359 = vset.pattern.permute.xlu0 2
  %360 = vperm.xlu0 %359, %v124
  %v361 = vpop.permute.xlu0 %360
  %363 = vset.pattern.permute.xlu0 2
  %364 = vperm.xlu0 %363, %v125
  %v365 = vpop.permute.xlu0 %364
  %367 = vset.pattern.permute.xlu0 2
  %368 = vperm.xlu0 %367, %v126
  %v369 = vpop.permute.xlu0 %368
  %371 = vset.pattern.permute.xlu0 2
  %372 = vperm.xlu0 %371, %v127
  %v373 = vpop.permute.xlu0 %372
  %375 = vset.pattern.permute.xlu0 2
  %376 = vperm.xlu0 %375, %v128
  %v377 = vpop.permute.xlu0 %376
  %379 = vset.pattern.permute.xlu0 2
  %380 = vperm.xlu0 %379, %v129
  %v381 = vpop.permute.xlu0 %380
  %383 = vset.pattern.permute.xlu0 2
  %384 = vperm.xlu0 %383, %v130
  %v385 = vpop.permute.xlu0 %384
  %387 = vset.pattern.permute.xlu0 2
  %388 = vperm.xlu0 %387, %v131
  %v389 = vpop.permute.xlu0 %388
  %391 = vset.pattern.permute.xlu0 2
  %392 = vperm.xlu0 %391, %v132
  %v393 = vpop.permute.xlu0 %392
  %395 = vset.pattern.permute.xlu0 2
  %396 = vperm.xlu0 %395, %v133
  %v397 = vpop.permute.xlu0 %396
  %399 = vset.pattern.permute.xlu0 2
  %400 = vperm.xlu0 %399, %v134
  %v401 = vpop.permute.xlu0 %400
  %403 = vset.pattern.permute.xlu0 2
  %404 = vperm.xlu0 %403, %v135
  %v405 = vpop.permute.xlu0 %404
  %407 = vset.pattern.permute.xlu0 2
  %408 = vperm.xlu0 %407, %v136
  %v409 = vpop.permute.xlu0 %408
  %411 = vset.pattern.permute.xlu0 2
  %412 = vperm.xlu0 %411, %v137
  %v413 = vpop.permute.xlu0 %412
  %415 = vset.pattern.permute.xlu0 2
  %416 = vperm.xlu0 %415, %v138
  %v417 = vpop.permute.xlu0 %416
  %419 = vset.pattern.permute.xlu0 2
  %420 = vperm.xlu0 %419, %v139
  %v421 = vpop.permute.xlu0 %420
  %v423 = vlaneseq
  %v424 = vshrl.u32 %v423, 7
  %v425 = vsub.s32 0, %v424
  %v426 = vrot.slane %v358, %v425
  %v427 = vmul.f32 %v361, %v426
  %v428 = vmul.f32 %v365, %v426
  %v429 = vmul.f32 %v369, %v426
  %v430 = vmul.f32 %v373, %v426
  %v431 = vmul.f32 %v377, %v426
  %v432 = vmul.f32 %v381, %v426
  %v433 = vmul.f32 %v385, %v426
  %v434 = vmul.f32 %v389, %v426
  %v435 = vmul.f32 %v393, %v426
  %v436 = vmul.f32 %v397, %v426
  %v437 = vmul.f32 %v401, %v426
  %v438 = vmul.f32 %v405, %v426
  %v439 = vmul.f32 %v409, %v426
  %v440 = vmul.f32 %v413, %v426
  %v441 = vmul.f32 %v417, %v426
  %v442 = vmul.f32 %v421, %v426
  %v443 = vadd.f32 %v342, %v427
  %v444 = vadd.f32 %v343, %v428
  %v445 = vadd.f32 %v344, %v429
  %v446 = vadd.f32 %v345, %v430
  %v447 = vadd.f32 %v346, %v431
  %v448 = vadd.f32 %v347, %v432
  %v449 = vadd.f32 %v348, %v433
  %v450 = vadd.f32 %v349, %v434
  %v451 = vadd.f32 %v350, %v435
  %v452 = vadd.f32 %v351, %v436
  %v453 = vadd.f32 %v352, %v437
  %v454 = vadd.f32 %v353, %v438
  %v455 = vadd.f32 %v354, %v439
  %v456 = vadd.f32 %v355, %v440
  %v457 = vadd.f32 %v356, %v441
  %v458 = vadd.f32 %v357, %v442
  %v459 = vmax.f32 %v443, 0.0
  %v460 = vmax.f32 %v444, 0.0
  %v461 = vmax.f32 %v445, 0.0
  %v462 = vmax.f32 %v446, 0.0
  %v463 = vmax.f32 %v447, 0.0
  %v464 = vmax.f32 %v448, 0.0
  %v465 = vmax.f32 %v449, 0.0
  %v466 = vmax.f32 %v450, 0.0
  %v467 = vmax.f32 %v451, 0.0
  %v468 = vmax.f32 %v452, 0.0
  %v469 = vmax.f32 %v453, 0.0
  %v470 = vmax.f32 %v454, 0.0
  %v471 = vmax.f32 %v455, 0.0
  %v472 = vmax.f32 %v456, 0.0
  %v473 = vmax.f32 %v457, 0.0
  %v474 = vmax.f32 %v458, 0.0
  %v475 = vld [vmem:[%s3] sm:$0xff]
  %v476 = vld [vmem:[%s3 + $0x8] sm:$0xff]
  %v477 = vld [vmem:[%s3 + $0x10] sm:$0xff]
  %v478 = vld [vmem:[%s3 + $0x18] sm:$0xff]
  %v479 = vld [vmem:[%s3 + $0x20] sm:$0xff]
  %v480 = vld [vmem:[%s3 + $0x28] sm:$0xff]
  %v481 = vld [vmem:[%s3 + $0x30] sm:$0xff]
  %v482 = vld [vmem:[%s3 + $0x38] sm:$0xff]
  %v483 = vld [vmem:[%s3 + $0x40] sm:$0xff]
  %v484 = vld [vmem:[%s3 + $0x48] sm:$0xff]
  %v485 = vld [vmem:[%s3 + $0x50] sm:$0xff]
  %v486 = vld [vmem:[%s3 + $0x58] sm:$0xff]
  %v487 = vld [vmem:[%s3 + $0x60] sm:$0xff]
  %v488 = vld [vmem:[%s3 + $0x68] sm:$0xff]
  %v489 = vld [vmem:[%s3 + $0x70] sm:$0xff]
  %v490 = vld [vmem:[%s3 + $0x78] sm:$0xff]
  %v491 = vld [vmem:[%s4] sm:$0xff]
  %v492 = vld [vmem:[%s4 + $0x8] sm:$0xff]
  %v493 = vld [vmem:[%s4 + $0x10] sm:$0xff]
  %v494 = vld [vmem:[%s4 + $0x18] sm:$0xff]
  %v495 = vld [vmem:[%s4 + $0x20] sm:$0xff]
  %v496 = vld [vmem:[%s4 + $0x28] sm:$0xff]
  %v497 = vld [vmem:[%s4 + $0x30] sm:$0xff]
  %v498 = vld [vmem:[%s4 + $0x38] sm:$0xff]
  %v499 = vld [vmem:[%s4 + $0x40] sm:$0xff]
  %v500 = vld [vmem:[%s4 + $0x48] sm:$0xff]
  %v501 = vld [vmem:[%s4 + $0x50] sm:$0xff]
  %v502 = vld [vmem:[%s4 + $0x58] sm:$0xff]
  %v503 = vld [vmem:[%s4 + $0x60] sm:$0xff]
  %v504 = vld [vmem:[%s4 + $0x68] sm:$0xff]
  %v505 = vld [vmem:[%s4 + $0x70] sm:$0xff]
  %v506 = vld [vmem:[%s4 + $0x78] sm:$0xff]
  %508 = vset.pattern.permute.xlu0 0
  %509 = vperm.xlu0 %508, %v491
  %v510 = vpop.permute.xlu0 %509
  %513 = vset.pattern.permute.xlu0 0
  %514 = vperm.xlu0 %513, %v492
  %v515 = vpop.permute.xlu0 %514
  %518 = vset.pattern.permute.xlu0 0
  %519 = vperm.xlu0 %518, %v493
  %v520 = vpop.permute.xlu0 %519
  %523 = vset.pattern.permute.xlu0 0
  %524 = vperm.xlu0 %523, %v494
  %v525 = vpop.permute.xlu0 %524
  %528 = vset.pattern.permute.xlu0 0
  %529 = vperm.xlu0 %528, %v495
  %v530 = vpop.permute.xlu0 %529
  %533 = vset.pattern.permute.xlu0 0
  %534 = vperm.xlu0 %533, %v496
  %v535 = vpop.permute.xlu0 %534
  %538 = vset.pattern.permute.xlu0 0
  %539 = vperm.xlu0 %538, %v497
  %v540 = vpop.permute.xlu0 %539
  %543 = vset.pattern.permute.xlu0 0
  %544 = vperm.xlu0 %543, %v498
  %v545 = vpop.permute.xlu0 %544
  %548 = vset.pattern.permute.xlu0 0
  %549 = vperm.xlu0 %548, %v499
  %v550 = vpop.permute.xlu0 %549
  %553 = vset.pattern.permute.xlu0 0
  %554 = vperm.xlu0 %553, %v500
  %v555 = vpop.permute.xlu0 %554
  %558 = vset.pattern.permute.xlu0 0
  %559 = vperm.xlu0 %558, %v501
  %v560 = vpop.permute.xlu0 %559
  %563 = vset.pattern.permute.xlu0 0
  %564 = vperm.xlu0 %563, %v502
  %v565 = vpop.permute.xlu0 %564
  %568 = vset.pattern.permute.xlu0 0
  %569 = vperm.xlu0 %568, %v503
  %v570 = vpop.permute.xlu0 %569
  %573 = vset.pattern.permute.xlu0 0
  %574 = vperm.xlu0 %573, %v504
  %v575 = vpop.permute.xlu0 %574
  %578 = vset.pattern.permute.xlu0 0
  %579 = vperm.xlu0 %578, %v505
  %v580 = vpop.permute.xlu0 %579
  %583 = vset.pattern.permute.xlu0 0
  %584 = vperm.xlu0 %583, %v506
  %v585 = vpop.permute.xlu0 %584
  %587 = vmatprep.subr.mxu0 0.0
  %588 = vmatpush1.msra.mxu0 %v459
  %589 = vmatprep.subr.mxu0 0.0
  %590 = vmatpush1.msra.mxu0 %v460
  %591 = vmatprep.subr.mxu0 0.0
  %592 = vmatpush1.msra.mxu0 %v461
  %593 = vmatprep.subr.mxu0 0.0
  %594 = vmatpush1.msra.mxu0 %v462
  %595 = vmatprep.subr.mxu0 0.0
  %596 = vmatpush1.msra.mxu0 %v463
  %597 = vmatprep.subr.mxu0 0.0
  %598 = vmatpush1.msra.mxu0 %v464
  %599 = vmatprep.subr.mxu0 0.0
  %600 = vmatpush1.msra.mxu0 %v465
  %601 = vmatprep.subr.mxu0 0.0
  %602 = vmatpush1.msra.mxu0 %v466
  %603 = vmatprep.subr.mxu0 0.0
  %604 = vmatpush1.msra.mxu0 %v467
  %605 = vmatprep.subr.mxu0 0.0
  %606 = vmatpush1.msra.mxu0 %v468
  %607 = vmatprep.subr.mxu0 0.0
  %608 = vmatpush1.msra.mxu0 %v469
  %609 = vmatprep.subr.mxu0 0.0
  %610 = vmatpush1.msra.mxu0 %v470
  %611 = vmatprep.subr.mxu0 0.0
  %612 = vmatpush1.msra.mxu0 %v471
  %613 = vmatprep.subr.mxu0 0.0
  %614 = vmatpush1.msra.mxu0 %v472
  %615 = vmatprep.subr.mxu0 0.0
  %616 = vmatpush1.msra.mxu0 %v473
  %617 = vmatprep.subr.mxu0 0.0
  %618 = vmatpush1.msra.mxu0 %v474
  %619 = vmatprep.subr.mxu0 0.0
  %620 = vmatpush1.msra.mxu0 0.0
  %621 = vmatprep.subr.mxu0 0.0
  %622 = vmatpush1.msra.mxu0 0.0
  %623 = vmatprep.subr.mxu0 0.0
  %624 = vmatpush1.msra.mxu0 0.0
  %625 = vmatprep.subr.mxu0 0.0
  %626 = vmatpush1.msra.mxu0 0.0
  %627 = vmatprep.subr.mxu0 0.0
  %628 = vmatpush1.msra.mxu0 0.0
  %629 = vmatprep.subr.mxu0 0.0
  %630 = vmatpush1.msra.mxu0 0.0
  %631 = vmatprep.subr.mxu0 0.0
  %632 = vmatpush1.msra.mxu0 0.0
  %633 = vmatprep.subr.mxu0 0.0
  %634 = vmatpush1.msra.mxu0 0.0
  %635 = vmatprep.subr.mxu0 0.0
  %636 = vmatpush1.msra.mxu0 0.0
  %637 = vmatprep.subr.mxu0 0.0
  %638 = vmatpush1.msra.mxu0 0.0
  %639 = vmatprep.subr.mxu0 0.0
  %640 = vmatpush1.msra.mxu0 0.0
  %641 = vmatprep.subr.mxu0 0.0
  %642 = vmatpush1.msra.mxu0 0.0
  %643 = vmatprep.subr.mxu0 0.0
  %644 = vmatpush1.msra.mxu0 0.0
  %645 = vmatprep.subr.mxu0 0.0
  %646 = vmatpush1.msra.mxu0 0.0
  %647 = vmatprep.subr.mxu0 0.0
  %648 = vmatpush1.msra.mxu0 0.0
  %649 = vmatprep.subr.mxu0 0.0
  %650 = vmatpush1.msra.mxu0 0.0
  %651 = vmatprep.mubr.f32.mxu0 0.0
  %652 = vmatmul.mubr.f32.gmra.mrb[0].mxu0 %v475
  %v653 = vpop.f32.mrb[0].mxu0
  %v654 = vadd.f32 %v510, %v653
  %v655 = vpop.f32.mrb[0].mxu0
  %656 = vmatprep.mubr.f32.mxu0 0.0
  %657 = vmatmul.mubr.f32.gmra.mrb[0].mxu0 %v476
  %v658 = vpop.f32.mrb[0].mxu0
  %v659 = vadd.f32 %v515, %v658
  %v660 = vpop.f32.mrb[0].mxu0
  %661 = vmatprep.mubr.f32.mxu0 0.0
  %662 = vmatmul.mubr.f32.gmra.mrb[0].mxu0 %v477
  %v663 = vpop.f32.mrb[0].mxu0
  %v664 = vadd.f32 %v520, %v663
  %v665 = vpop.f32.mrb[0].mxu0
  %666 = vmatprep.mubr.f32.mxu0 0.0
  %667 = vmatmul.mubr.f32.gmra.mrb[0].mxu0 %v478
  %v668 = vpop.f32.mrb[0].mxu0
  %v669 = vadd.f32 %v525, %v668
  %v670 = vpop.f32.mrb[0].mxu0
  %671 = vmatprep.mubr.f32.mxu0 0.0
  %672 = vmatmul.mubr.f32.gmra.mrb[0].mxu0 %v479
  %v673 = vpop.f32.mrb[0].mxu0
  %v674 = vadd.f32 %v530, %v673
  %v675 = vpop.f32.mrb[0].mxu0
  %676 = vmatprep.mubr.f32.mxu0 0.0
  %677 = vmatmul.mubr.f32.gmra.mrb[0].mxu0 %v480
  %v678 = vpop.f32.mrb[0].mxu0
  %v679 = vadd.f32 %v535, %v678
  %v680 = vpop.f32.mrb[0].mxu0
  %681 = vmatprep.mubr.f32.mxu0 0.0
  %682 = vmatmul.mubr.f32.gmra.mrb[0].mxu0 %v481
  %v683 = vpop.f32.mrb[0].mxu0
  %v684 = vadd.f32 %v540, %v683
  %v685 = vpop.f32.mrb[0].mxu0
  %686 = vmatprep.mubr.f32.mxu0 0.0
  %687 = vmatmul.mubr.f32.gmra.mrb[0].mxu0 %v482
  %v688 = vpop.f32.mrb[0].mxu0
  %v689 = vadd.f32 %v545, %v688
  %v690 = vpop.f32.mrb[0].mxu0
  %691 = vmatprep.mubr.f32.mxu0 0.0
  %692 = vmatmul.mubr.f32.gmra.mrb[0].mxu0 %v483
  %v693 = vpop.f32.mrb[0].mxu0
  %v694 = vadd.f32 %v550, %v693
  %v695 = vpop.f32.mrb[0].mxu0
  %696 = vmatprep.mubr.f32.mxu0 0.0
  %697 = vmatmul.mubr.f32.gmra.mrb[0].mxu0 %v484
  %v698 = vpop.f32.mrb[0].mxu0
  %v699 = vadd.f32 %v555, %v698
  %v700 = vpop.f32.mrb[0].mxu0
  %701 = vmatprep.mubr.f32.mxu0 0.0
  %702 = vmatmul.mubr.f32.gmra.mrb[0].mxu0 %v485
  %v703 = vpop.f32.mrb[0].mxu0
  %v704 = vadd.f32 %v560, %v703
  %v705 = vpop.f32.mrb[0].mxu0
  %706 = vmatprep.mubr.f32.mxu0 0.0
  %707 = vmatmul.mubr.f32.gmra.mrb[0].mxu0 %v486
  %v708 = vpop.f32.mrb[0].mxu0
  %v709 = vadd.f32 %v565, %v708
  %v710 = vpop.f32.mrb[0].mxu0
  %711 = vmatprep.mubr.f32.mxu0 0.0
  %712 = vmatmul.mubr.f32.gmra.mrb[0].mxu0 %v487
  %v713 = vpop.f32.mrb[0].mxu0
  %v714 = vadd.f32 %v570, %v713
  %v715 = vpop.f32.mrb[0].mxu0
  %716 = vmatprep.mubr.f32.mxu0 0.0
  %717 = vmatmul.mubr.f32.gmra.mrb[0].mxu0 %v488
  %v718 = vpop.f32.mrb[0].mxu0
  %v719 = vadd.f32 %v575, %v718
  %v720 = vpop.f32.mrb[0].mxu0
  %721 = vmatprep.mubr.f32.mxu0 0.0
  %722 = vmatmul.mubr.f32.gmra.mrb[0].mxu0 %v489
  %v723 = vpop.f32.mrb[0].mxu0
  %v724 = vadd.f32 %v580, %v723
  %v725 = vpop.f32.mrb[0].mxu0
  %726 = vmatprep.mubr.f32.mxu0 0.0
  %727 = vmatmul.mubr.f32.gmra.mrb[0].mxu0 %v490
  %v728 = vpop.f32.mrb[0].mxu0
  %v729 = vadd.f32 %v585, %v728
  %v730 = vpop.f32.mrb[0].mxu0
  %731 = vdwg.mxu0
  %v732 = vmax.f32 %v654, 0.0
  %v733 = vmax.f32 %v659, 0.0
  %v734 = vmax.f32 %v664, 0.0
  %v735 = vmax.f32 %v669, 0.0
  %v736 = vmax.f32 %v674, 0.0
  %v737 = vmax.f32 %v679, 0.0
  %v738 = vmax.f32 %v684, 0.0
  %v739 = vmax.f32 %v689, 0.0
  %v740 = vmax.f32 %v694, 0.0
  %v741 = vmax.f32 %v699, 0.0
  %v742 = vmax.f32 %v704, 0.0
  %v743 = vmax.f32 %v709, 0.0
  %v744 = vmax.f32 %v714, 0.0
  %v745 = vmax.f32 %v719, 0.0
  %v746 = vmax.f32 %v724, 0.0
  %v747 = vmax.f32 %v729, 0.0
  %v748 = vld [vmem:[%s5] sm:$0x1]
  %v749 = vld [vmem:[#allocation2] sm:$0x1]
  %751 = vset.pattern.permute.xlu0 0
  %752 = vperm.xlu0 %751, %v749
  %v753 = vpop.permute.xlu0 %752
  %v755 = vlaneseq
  %v756 = vshrl.u32 %v755, 7
  %v757 = vsub.s32 0, %v756
  %v758 = vrot.slane %v753, %v757
  %759 = vmatprep.subr.mxu0 0.0
  %760 = vmatpush1.msra.mxu0 %v732
  %761 = vmatprep.subr.mxu0 0.0
  %762 = vmatpush1.msra.mxu0 %v733
  %763 = vmatprep.subr.mxu0 0.0
  %764 = vmatpush1.msra.mxu0 %v734
  %765 = vmatprep.subr.mxu0 0.0
  %766 = vmatpush1.msra.mxu0 %v735
  %767 = vmatprep.subr.mxu0 0.0
  %768 = vmatpush1.msra.mxu0 %v736
  %769 = vmatprep.subr.mxu0 0.0
  %770 = vmatpush1.msra.mxu0 %v737
  %771 = vmatprep.subr.mxu0 0.0
  %772 = vmatpush1.msra.mxu0 %v738
  %773 = vmatprep.subr.mxu0 0.0
  %774 = vmatpush1.msra.mxu0 %v739
  %775 = vmatprep.subr.mxu0 0.0
  %776 = vmatpush1.msra.mxu0 %v740
  %777 = vmatprep.subr.mxu0 0.0
  %778 = vmatpush1.msra.mxu0 %v741
  %779 = vmatprep.subr.mxu0 0.0
  %780 = vmatpush1.msra.mxu0 %v742
  %781 = vmatprep.subr.mxu0 0.0
  %782 = vmatpush1.msra.mxu0 %v743
  %783 = vmatprep.subr.mxu0 0.0
  %784 = vmatpush1.msra.mxu0 %v744
  %785 = vmatprep.subr.mxu0 0.0
  %786 = vmatpush1.msra.mxu0 %v745
  %787 = vmatprep.subr.mxu0 0.0
  %788 = vmatpush1.msra.mxu0 %v746
  %789 = vmatprep.subr.mxu0 0.0
  %790 = vmatpush1.msra.mxu0 %v747
  %791 = vmatprep.subr.mxu0 0.0
  %792 = vmatpush1.msra.mxu0 0.0
  %793 = vmatprep.subr.mxu0 0.0
  %794 = vmatpush1.msra.mxu0 0.0
  %795 = vmatprep.subr.mxu0 0.0
  %796 = vmatpush1.msra.mxu0 0.0
  %797 = vmatprep.subr.mxu0 0.0
  %798 = vmatpush1.msra.mxu0 0.0
  %799 = vmatprep.subr.mxu0 0.0
  %800 = vmatpush1.msra.mxu0 0.0
  %801 = vmatprep.subr.mxu0 0.0
  %802 = vmatpush1.msra.mxu0 0.0
  %803 = vmatprep.subr.mxu0 0.0
  %804 = vmatpush1.msra.mxu0 0.0
  %805 = vmatprep.subr.mxu0 0.0
  %806 = vmatpush1.msra.mxu0 0.0
  %807 = vmatprep.subr.mxu0 0.0
  %808 = vmatpush1.msra.mxu0 0.0
  %809 = vmatprep.subr.mxu0 0.0
  %810 = vmatpush1.msra.mxu0 0.0
  %811 = vmatprep.subr.mxu0 0.0
  %812 = vmatpush1.msra.mxu0 0.0
  %813 = vmatprep.subr.mxu0 0.0
  %814 = vmatpush1.msra.mxu0 0.0
  %815 = vmatprep.subr.mxu0 0.0
  %816 = vmatpush1.msra.mxu0 0.0
  %817 = vmatprep.subr.mxu0 0.0
  %818 = vmatpush1.msra.mxu0 0.0
  %819 = vmatprep.subr.mxu0 0.0
  %820 = vmatpush1.msra.mxu0 0.0
  %821 = vmatprep.subr.mxu0 0.0
  %822 = vmatpush1.msra.mxu0 0.0
  %823 = vmatprep.mubr.f32.mxu0 0.0
  %824 = vmatmul.mubr.f32.gmra.mrb[0].mxu0 %v748
  %v825 = vpop.f32.mrb[0].mxu0
  %v826 = vadd.f32 %v758, %v825
  %v827 = vpop.f32.mrb[0].mxu0
  %828 = vdwg.mxu0
  %v829 = vxor.u32 %v826, 2147483648
  %v830 = vmul.f32 %v829, 1.442695
  %v831 = vpow.pop %v830
  %v832 = vadd.f32 %v831, 1.0
  %v833 = vrcp.pop %v832
  %v834 = vmul.f32 1.0, %v833
  %835 = vst [vmem:[%s7] sm:$0x1] %v834
  // Predicated region
  $region30: #{ours_neural_3d_forward.1} parent=0 // pred_check
    _
  $region31: #{ours_neural_3d_forward.1} parent=0 // pred_check_branch
    %837 = sbr.rel (0) target = $region33
  $region32: #{ours_neural_3d_forward.1} parent=0 // pred_region
    _
  $region33: #{ours_neural_3d_forward.1} parent=0 // pred_fallthru
    _
  // Predicated region
  $region34: #{ours_neural_3d_forward.1} parent=0 // pred_check
    _
  $region35: #{ours_neural_3d_forward.1} parent=0 // pred_check_branch
    %839 = sbr.rel (0) target = $region37
  $region36: #{ours_neural_3d_forward.1} parent=0 // pred_region
    _
  $region37: #{ours_neural_3d_forward.1} parent=0 // pred_fallthru
    _

</llo_original>
